<compile_context>
chip_gen: v7x
topology: tpu7x:2x2x1
jax: 0.10.0
libtpu: 0.0.40
codegen_flags: <defaults>
</compile_context>

<pallas_src>
import jax
import jax.numpy as jnp
from jax.experimental import pallas as pl
from jax.experimental.pallas import tpu as pltpu


_INV_SQRT2 = 0.7071067811865476  # 1/sqrt(2), for exact (erf-based) GELU


def expert_kernel(x_ref, w1_ref, b1_ref, w2_ref, b2_ref, o_ref):
    # Layer 1: [bb, Din] (bf16) @ [Din, H] (bf16) -> f32 accumulate
    h = jnp.dot(x_ref[...], w1_ref[...], preferred_element_type=jnp.float32)
    h = h + b1_ref[...]                      # bias add in f32
    # Exact GELU (matches torch.nn.GELU() default, erf-based), f32 math.
    h = 0.5 * h * (1.0 + jax.lax.erf(h * jnp.float32(_INV_SQRT2)))
    # Layer 2: cast activation to bf16 only for the matmul, accumulate in f32.
    y = jnp.dot(h.astype(w2_ref.dtype), w2_ref[...],
                preferred_element_type=jnp.float32)
    y = y + b2_ref[...]
    o_ref[...] = y.astype(o_ref.dtype)


def _round_up(n, m):
    return ((n + m - 1) // m) * m


def _pad2d(a, rows, cols):
    r, c = a.shape
    if r == rows and c == cols:
        return a
    return jnp.pad(a, ((0, rows - r), (0, cols - c)))


def expert_forward(x, w1, b1, w2, b2, *, block_b=128):
    """x: [B, Din]; w1: [Din, H]; b1: [H] or [1, H]; w2: [H, Dout]; b2: [Dout] or [1, Dout]."""
    B, Din = x.shape
    H = w1.shape[1]
    Dout = w2.shape[1]

    LANE, SUBLANE = 128, 8
    Dinp = _round_up(Din, LANE)
    Hp = _round_up(H, LANE)
    Doutp = _round_up(Dout, LANE)

    # Batch tile: at most `block_b` rows, multiple of 8 sublanes.
    bb = min(block_b, _round_up(B, SUBLANE))
    Bp = _round_up(B, bb)

    # Zero-pad + cast matmul operands to bf16; keep biases f32.
    xp = _pad2d(x, Bp, Dinp).astype(jnp.bfloat16)
    w1p = _pad2d(w1, Dinp, Hp).astype(jnp.bfloat16)
    b1p = _pad2d(jnp.reshape(b1, (1, -1)), 1, Hp).astype(jnp.float32)
    w2p = _pad2d(w2, Hp, Doutp).astype(jnp.bfloat16)
    b2p = _pad2d(jnp.reshape(b2, (1, -1)), 1, Doutp).astype(jnp.float32)

    grid = (Bp // bb,)

    out = pl.pallas_call(
        expert_kernel,
        out_shape=jax.ShapeDtypeStruct((Bp, Doutp), jnp.float32),
        grid=grid,
        in_specs=[
            pl.BlockSpec((bb, Dinp), lambda i: (i, 0)),    # x: new tile per step
            pl.BlockSpec((Dinp, Hp), lambda i: (0, 0)),    # w1: VMEM-resident
            pl.BlockSpec((1, Hp), lambda i: (0, 0)),       # b1: VMEM-resident
            pl.BlockSpec((Hp, Doutp), lambda i: (0, 0)),   # w2: VMEM-resident
            pl.BlockSpec((1, Doutp), lambda i: (0, 0)),    # b2: VMEM-resident
        ],
        out_specs=pl.BlockSpec((bb, Doutp), lambda i: (i, 0)),
        compiler_params=pltpu.CompilerParams(
            dimension_semantics=("parallel",),   # shard batch tiles across TCs (v7x)
            # Above the 32 MiB scoped default, within v7x's 64 MiB physical VMEM.
            vmem_limit_bytes=64 * 1024 * 1024,
        ),
    )(xp, w1p, b1p, w2p, b2p)

    # Strip batch / lane padding.
    return out[:B, :Dout]


def init_params(key, input_dim, hidden_dim, output_dim):
    """Deterministic init mirroring nn.Linear shapes (stored transposed)."""
    k1, k2, k3, k4 = jax.random.split(key, 4)
    bound1 = 1.0 / jnp.sqrt(input_dim)
    bound2 = 1.0 / jnp.sqrt(hidden_dim)
    w1 = jax.random.uniform(k1, (input_dim, hidden_dim), jnp.float32, -bound1, bound1)
    b1 = jax.random.uniform(k2, (1, hidden_dim), jnp.float32, -bound1, bound1)
    w2 = jax.random.uniform(k3, (hidden_dim, output_dim), jnp.float32, -bound2, bound2)
    b2 = jax.random.uniform(k4, (1, output_dim), jnp.float32, -bound2, bound2)
    return w1, b1, w2, b2


if __name__ == "__main__":
    # Small shapes consistent with the module; batch=256 exercises the
    # batch-tiled grid (2 tiles of 128) while staying tiny.
    batch, input_dim, hidden_dim, output_dim = 256, 32, 64, 32

    key = jax.random.PRNGKey(0)
    kx, kp = jax.random.split(key)
    x = jax.random.normal(kx, (batch, input_dim), jnp.float32)
    w1, b1, w2, b2 = init_params(kp, input_dim, hidden_dim, output_dim)

    y = expert_forward(x, w1, b1, w2, b2)
    jax.block_until_ready(y)
    assert y.shape == (batch, output_dim)

    # Reference with matched bf16 matmul inputs + f32 accumulation (same
    # numerics as the kernel); exact erf GELU in f32.
    x_bf = x.astype(jnp.bfloat16)
    w1_bf = w1.astype(jnp.bfloat16)
    w2_bf = w2.astype(jnp.bfloat16)
    h_ref = jnp.dot(x_bf, w1_bf, preferred_element_type=jnp.float32) + b1
    h_ref = jax.nn.gelu(h_ref, approximate=False)
    ref = jnp.dot(h_ref.astype(jnp.bfloat16), w2_bf,
                  preferred_element_type=jnp.float32) + b2
    assert jnp.allclose(y, ref, atol=5e-3, rtol=5e-3)

    # Loose sanity check against the full-f32 PyTorch-equivalent math
    # (bf16 matmul inputs change numerics slightly).
    ref_f32 = jax.nn.gelu(x @ w1 + b1, approximate=False) @ w2 + b2
    assert jnp.allclose(y, ref_f32, atol=1e-1, rtol=1e-1)

    print("KERNEL_OK")
</pallas_src>

<mosaic_0001>
module attributes {stable_mosaic.version = 11 : i64} {
  func.func @expert_kernel(%arg0: i32, %arg1: memref<128x128xbf16, #tpu.memory_space<vmem>>, %arg2: memref<128x128xbf16, #tpu.memory_space<vmem>>, %arg3: memref<1x128xf32, #tpu.memory_space<vmem>>, %arg4: memref<128x128xbf16, #tpu.memory_space<vmem>>, %arg5: memref<1x128xf32, #tpu.memory_space<vmem>>, %arg6: memref<128x128xf32, #tpu.memory_space<vmem>>) attributes {dimension_semantics = [#tpu.dimension_semantics<parallel>], iteration_bounds = array<i64: 2>, scalar_prefetch = 0 : i64, scratch_operands = 0 : i64, tpu.core_type = #tpu.core_type<tc>, window_params = [{transform_indices = @transform_0, window_bounds = array<i64: 128, 128>}, {pipeline_mode = #tpu.pipeline_mode<synchronous>, transform_indices = @transform_1, window_bounds = array<i64: 128, 128>}, {pipeline_mode = #tpu.pipeline_mode<synchronous>, transform_indices = @transform_2, window_bounds = array<i64: 1, 128>}, {pipeline_mode = #tpu.pipeline_mode<synchronous>, transform_indices = @transform_3, window_bounds = array<i64: 128, 128>}, {pipeline_mode = #tpu.pipeline_mode<synchronous>, transform_indices = @transform_4, window_bounds = array<i64: 1, 128>}, {transform_indices = @transform_5, window_bounds = array<i64: 128, 128>}]} {
    %c0 = arith.constant 0 : index
    %c0_0 = arith.constant 0 : index
    %0 = vector.load %arg1[%c0, %c0_0] : memref<128x128xbf16, #tpu.memory_space<vmem>>, vector<128x128xbf16>
    %c0_1 = arith.constant 0 : index
    %c0_2 = arith.constant 0 : index
    %1 = vector.load %arg2[%c0_1, %c0_2] : memref<128x128xbf16, #tpu.memory_space<vmem>>, vector<128x128xbf16>
    %cst = arith.constant dense<0.000000e+00> : vector<128x128xf32>
    %2 = tpu.matmul %0, %1, %cst {dimension_numbers = #tpu.dot_dimension_numbers<[1], [0], [0], [1], [0, 0, 1, 1], [], []>} : vector<128x128xbf16>, vector<128x128xbf16>, vector<128x128xf32> -> vector<128x128xf32>
    %c0_3 = arith.constant 0 : index
    %c0_4 = arith.constant 0 : index
    %3 = vector.load %arg3[%c0_3, %c0_4] : memref<1x128xf32, #tpu.memory_space<vmem>>, vector<1x128xf32>
    %4 = vector.broadcast %3 : vector<1x128xf32> to vector<128x128xf32>
    %5 = arith.addf %2, %4 : vector<128x128xf32>
    %cst_5 = arith.constant 5.000000e-01 : f32
    %6 = vector.broadcast %cst_5 : f32 to vector<128x128xf32>
    %7 = arith.mulf %6, %5 : vector<128x128xf32>
    %cst_6 = arith.constant 0.707106769 : f32
    %8 = vector.broadcast %cst_6 : f32 to vector<128x128xf32>
    %9 = arith.mulf %5, %8 : vector<128x128xf32>
    %10 = math.erf %9 : vector<128x128xf32>
    %cst_7 = arith.constant 1.000000e+00 : f32
    %11 = vector.broadcast %cst_7 : f32 to vector<128x128xf32>
    %12 = arith.addf %11, %10 : vector<128x128xf32>
    %13 = arith.mulf %7, %12 : vector<128x128xf32>
    %14 = arith.truncf %13 : vector<128x128xf32> to vector<128x128xbf16>
    %c0_8 = arith.constant 0 : index
    %c0_9 = arith.constant 0 : index
    %15 = vector.load %arg4[%c0_8, %c0_9] : memref<128x128xbf16, #tpu.memory_space<vmem>>, vector<128x128xbf16>
    %cst_10 = arith.constant dense<0.000000e+00> : vector<128x128xf32>
    %16 = tpu.matmul %14, %15, %cst_10 {dimension_numbers = #tpu.dot_dimension_numbers<[1], [0], [0], [1], [0, 0, 1, 1], [], []>} : vector<128x128xbf16>, vector<128x128xbf16>, vector<128x128xf32> -> vector<128x128xf32>
    %c0_11 = arith.constant 0 : index
    %c0_12 = arith.constant 0 : index
    %17 = vector.load %arg5[%c0_11, %c0_12] : memref<1x128xf32, #tpu.memory_space<vmem>>, vector<1x128xf32>
    %18 = vector.broadcast %17 : vector<1x128xf32> to vector<128x128xf32>
    %19 = arith.addf %16, %18 : vector<128x128xf32>
    %c0_13 = arith.constant 0 : index
    %c0_14 = arith.constant 0 : index
    %20 = vector.load %arg6[%c0_13, %c0_14] : memref<128x128xf32, #tpu.memory_space<vmem>>, vector<128x128xf32>
    tpu.vector_store %arg6[%c0_13, %c0_14], %19 {strides = array<i32>} : memref<128x128xf32, #tpu.memory_space<vmem>>, vector<128x128xf32>,
    return
  }
  func.func @transform_0(%arg0: i32) -> (i32, i32) {
    %c0_i32 = arith.constant 0 : i32
    %c0_i32_0 = arith.constant 0 : i32
    return %arg0, %c0_i32 : i32, i32
  }
  func.func @transform_1(%arg0: i32) -> (i32, i32) {
    %c0_i32 = arith.constant 0 : i32
    %c0_i32_0 = arith.constant 0 : i32
    %c0_i32_1 = arith.constant 0 : i32
    return %c0_i32, %c0_i32_0 : i32, i32
  }
  func.func @transform_2(%arg0: i32) -> (i32, i32) {
    %c0_i32 = arith.constant 0 : i32
    %c0_i32_0 = arith.constant 0 : i32
    %c0_i32_1 = arith.constant 0 : i32
    return %c0_i32, %c0_i32_0 : i32, i32
  }
  func.func @transform_3(%arg0: i32) -> (i32, i32) {
    %c0_i32 = arith.constant 0 : i32
    %c0_i32_0 = arith.constant 0 : i32
    %c0_i32_1 = arith.constant 0 : i32
    return %c0_i32, %c0_i32_0 : i32, i32
  }
  func.func @transform_4(%arg0: i32) -> (i32, i32) {
    %c0_i32 = arith.constant 0 : i32
    %c0_i32_0 = arith.constant 0 : i32
    %c0_i32_1 = arith.constant 0 : i32
    return %c0_i32, %c0_i32_0 : i32, i32
  }
  func.func @transform_5(%arg0: i32) -> (i32, i32) {
    %c0_i32 = arith.constant 0 : i32
    %c0_i32_0 = arith.constant 0 : i32
    return %arg0, %c0_i32 : i32, i32
  }
}

</mosaic_0001>

<llo_original>
// kernel: tpu_custom_call.1
$region0: #{tpu_custom_call.1}
  #allocation0 [shape = 'u32[]', space=smem, size = 0x4, offset = 0x4, fixed_abs, tag = 'smem constant byte address 0x4 - core index']
  #allocation1 [shape = 'u32[144,128]{1,0:T(1,128)}', space=vmem, size = 0x12000, scoped, tag = 'internal scratch']
  %s0 = inlined_call_operand.hbm [shape: bf16[256,128], index: 0, kind: input, shape index: {}]
  %s1 = inlined_call_operand.hbm [shape: bf16[128,128], index: 1, kind: input, shape index: {}]
  %s2 = inlined_call_operand.hbm [shape: f32[1,128], index: 2, kind: input, shape index: {}]
  %s3 = inlined_call_operand.hbm [shape: bf16[128,128], index: 3, kind: input, shape index: {}]
  %s4 = inlined_call_operand.hbm [shape: f32[1,128], index: 4, kind: input, shape index: {}]
  %s5 = inlined_call_operand.hbm [shape: f32[256,128], index: 5, kind: output, shape index: {}]
  %s6 = sld [smem:[#allocation0]]
  $region73: #{tpu_custom_call.1} parent=0
    _
  %s8 = ssub.s32 1, %s6
  %s9 = scalar_select 0, %s8, %s6
  $region1: #{tpu_custom_call.1} parent=0
    #allocation2 [shape = 'u8[65536]{0}', space=vmem, size = 0x10000, scoped, tag = 'input window, operand 0']
    #allocation3 [shape = 's32[2]{0}', space=sflag, size = 0x8, scoped, tag = 'scoped memory for tpu_custom_call.1']
    #allocation4 [shape = 's32[2]{0}', space=sflag, size = 0x8, scoped, tag = 'scoped memory for tpu_custom_call.1']
    #allocation5 [shape = 'u8[32768]{0}', space=vmem, size = 0x8000, scoped, tag = 'input window, operand 1, single buffered']
    #allocation6 [shape = 's32[1]{0}', space=sflag, size = 0x4, scoped, tag = 'scoped memory for tpu_custom_call.1']
    #allocation7 [shape = 'u8[512]{0}', space=vmem, size = 0x400, scoped, tag = 'input window, operand 2, single buffered']
    #allocation8 [shape = 'u8[32768]{0}', space=vmem, size = 0x8000, scoped, tag = 'input window, operand 3, single buffered']
    #allocation9 [shape = 's32[1]{0}', space=sflag, size = 0x4, scoped, tag = 'scoped memory for tpu_custom_call.1']
    #allocation10 [shape = 'u8[512]{0}', space=vmem, size = 0x400, scoped, tag = 'input window, operand 4, single buffered']
    #allocation11 [shape = 'u8[131072]{0}', space=vmem, size = 0x20000, scoped, tag = 'output window, operand 0']
    %10 = vsyncpa [#allocation3], 0
    %s11 = scalar_lea.sflag [#allocation3], 1
    %12 = vsyncpa %s11, 0
    %13 = vsyncpa [#allocation6], 0
    %14 = vsyncpa [#allocation9], 0
    %15 = vsyncpa [#allocation4], 0
    %s16 = scalar_lea.sflag [#allocation4], 1
    %17 = vsyncpa %s16, 0
    loop: start=0, step=1, limit=4
    $region2: #{tpu_custom_call.1} parent=1 // loop_pre_header
      _
    $region3: #{tpu_custom_call.1} parent=1 // loop_header
      %s19 = sphi 0, %s23
      %p20 = scmp.ge.s32.totalorder %s19, 4
      %s29 = sphi 0, %s31
      %s32 = sphi 0, %s29
      %s33 = sphi 0, %s32
      %s49 = sphi 0, %s33
      %s53 = sphi 0, %s53
      %s55 = sphi 0, %s53
      %s56 = sphi 0, %s55
      %s70 = sphi 0, %s56
      %s74 = sphi 0, %s74
      %s76 = sphi 0, %s74
      %s77 = sphi 0, %s76
      %s91 = sphi 0, %s77
      %s95 = sphi 0, %s95
      %s97 = sphi 0, %s95
      %s98 = sphi 0, %s97
      %s112 = sphi 0, %s98
      %s116 = sphi 0, %s116
      %s118 = sphi 0, %s116
      %s119 = sphi 0, %s118
      %s133 = sphi 0, %s119
      %s139 = sphi 0, %s141
      %s142 = sphi 0, %s139
      %s143 = sphi 0, %s142
      %s159 = sphi 0, %s143
    $region4: #{tpu_custom_call.1} parent=1 // loop_header_branch
      %22 = sbr.rel (%p20) target = $region8
    $region5: #{tpu_custom_call.1} parent=1 // loop_body
      %s24 = ssub.s32 %s19, 1
      %s25 = ssub.s32 %s19, 2
      %s26 = sadd.s32 %s19, 1
      %s27 = ssub.s32 %s19, %s26
      %p28 = scmp.eq.s32.totalorder %s27, 0
      %s30 = sadd.s32 %s29, 1
      %s31 = scalar_select %p28, %s29, %s30
      %p34 = pneg %p28
      %p35 = scmp.eq.s32.totalorder %s19, 1
      %p36 = por %p34, %p35
      %p37 = scmp.ne.s32.totalorder %s29, %s32
      %p38 = scmp.eq.s32.totalorder %s19, 0
      %p39 = por %p37, %p38
      %p40 = scmp.ne.s32.totalorder %s29, %s32
      %p41 = scmp.eq.s32.totalorder %s24, 1
      %p42 = por %p40, %p41
      %p43 = scmp.ne.s32.totalorder %s32, %s33
      %p44 = scmp.eq.s32.totalorder %s24, 0
      %p45 = por %p43, %p44
      %p46 = scmp.ne.s32.totalorder %s32, %s33
      %p47 = scmp.eq.s32.totalorder %s25, 1
      %p48 = por %p46, %p47
      %p50 = scmp.ne.s32.totalorder %s33, %s49
      %p51 = scmp.eq.s32.totalorder %s25, 0
      %p52 = por %p50, %p51
      %s54 = sadd.s32 %s53, 1
      %p57 = scmp.eq.s32.totalorder %s19, 1
      %p58 = scmp.ne.s32.totalorder %s53, %s55
      %p59 = scmp.eq.s32.totalorder %s19, 0
      %p60 = por %p58, %p59
      %p61 = scmp.ne.s32.totalorder %s53, %s55
      %p62 = scmp.eq.s32.totalorder %s24, 1
      %p63 = por %p61, %p62
      %p64 = scmp.ne.s32.totalorder %s55, %s56
      %p65 = scmp.eq.s32.totalorder %s24, 0
      %p66 = por %p64, %p65
      %p67 = scmp.ne.s32.totalorder %s55, %s56
      %p68 = scmp.eq.s32.totalorder %s25, 1
      %p69 = por %p67, %p68
      %p71 = scmp.ne.s32.totalorder %s56, %s70
      %p72 = scmp.eq.s32.totalorder %s25, 0
      %p73 = por %p71, %p72
      %s75 = sadd.s32 %s74, 1
      %p78 = scmp.eq.s32.totalorder %s19, 1
      %p79 = scmp.ne.s32.totalorder %s74, %s76
      %p80 = scmp.eq.s32.totalorder %s19, 0
      %p81 = por %p79, %p80
      %p82 = scmp.ne.s32.totalorder %s74, %s76
      %p83 = scmp.eq.s32.totalorder %s24, 1
      %p84 = por %p82, %p83
      %p85 = scmp.ne.s32.totalorder %s76, %s77
      %p86 = scmp.eq.s32.totalorder %s24, 0
      %p87 = por %p85, %p86
      %p88 = scmp.ne.s32.totalorder %s76, %s77
      %p89 = scmp.eq.s32.totalorder %s25, 1
      %p90 = por %p88, %p89
      %p92 = scmp.ne.s32.totalorder %s77, %s91
      %p93 = scmp.eq.s32.totalorder %s25, 0
      %p94 = por %p92, %p93
      %s96 = sadd.s32 %s95, 1
      %p99 = scmp.eq.s32.totalorder %s19, 1
      %p100 = scmp.ne.s32.totalorder %s95, %s97
      %p101 = scmp.eq.s32.totalorder %s19, 0
      %p102 = por %p100, %p101
      %p103 = scmp.ne.s32.totalorder %s95, %s97
      %p104 = scmp.eq.s32.totalorder %s24, 1
      %p105 = por %p103, %p104
      %p106 = scmp.ne.s32.totalorder %s97, %s98
      %p107 = scmp.eq.s32.totalorder %s24, 0
      %p108 = por %p106, %p107
      %p109 = scmp.ne.s32.totalorder %s97, %s98
      %p110 = scmp.eq.s32.totalorder %s25, 1
      %p111 = por %p109, %p110
      %p113 = scmp.ne.s32.totalorder %s98, %s112
      %p114 = scmp.eq.s32.totalorder %s25, 0
      %p115 = por %p113, %p114
      %s117 = sadd.s32 %s116, 1
      %p120 = scmp.eq.s32.totalorder %s19, 1
      %p121 = scmp.ne.s32.totalorder %s116, %s118
      %p122 = scmp.eq.s32.totalorder %s19, 0
      %p123 = por %p121, %p122
      %p124 = scmp.ne.s32.totalorder %s116, %s118
      %p125 = scmp.eq.s32.totalorder %s24, 1
      %p126 = por %p124, %p125
      %p127 = scmp.ne.s32.totalorder %s118, %s119
      %p128 = scmp.eq.s32.totalorder %s24, 0
      %p129 = por %p127, %p128
      %p130 = scmp.ne.s32.totalorder %s118, %s119
      %p131 = scmp.eq.s32.totalorder %s25, 1
      %p132 = por %p130, %p131
      %p134 = scmp.ne.s32.totalorder %s119, %s133
      %p135 = scmp.eq.s32.totalorder %s25, 0
      %p136 = por %p134, %p135
      %s137 = ssub.s32 %s19, %s26
      %p138 = scmp.eq.s32.totalorder %s137, 0
      %s140 = sadd.s32 %s139, 1
      %s141 = scalar_select %p138, %s139, %s140
      %p144 = pneg %p138
      %p145 = scmp.eq.s32.totalorder %s19, 1
      %p146 = por %p144, %p145
      %p147 = scmp.ne.s32.totalorder %s139, %s142
      %p148 = scmp.eq.s32.totalorder %s19, 0
      %p149 = por %p147, %p148
      %p150 = scmp.ne.s32.totalorder %s139, %s142
      %p151 = scmp.eq.s32.totalorder %s24, 1
      %p152 = por %p150, %p151
      %p153 = scmp.ne.s32.totalorder %s142, %s143
      %p154 = scmp.eq.s32.totalorder %s24, 0
      %p155 = por %p153, %p154
      %p156 = scmp.ne.s32.totalorder %s142, %s143
      %p157 = scmp.eq.s32.totalorder %s25, 1
      %p158 = por %p156, %p157
      %p160 = scmp.ne.s32.totalorder %s143, %s159
      %p161 = scmp.eq.s32.totalorder %s25, 0
      %p162 = por %p160, %p161
      %p163 = scmp.le.s32.totalorder 1, %s19
      %p164 = scmp.lt.s32.totalorder %s19, 3
      %p165 = pnand %p163, %p164
      %p166 = pneg %p165
      // Predicated region
      $region9: #{tpu_custom_call.1} parent=5 // pred_check
        _
      $region10: #{tpu_custom_call.1} parent=5 // pred_check_branch
        %168 = sbr.rel (%p165) target = $region12
      $region11: #{tpu_custom_call.1} parent=5 // pred_region
        %s169 = ssub.s32 %s19, 1
        // Predicated region
        $region13: #{tpu_custom_call.1} parent=11 // pred_check
          %p170 = pneg %p66
        $region14: #{tpu_custom_call.1} parent=11 // pred_check_branch
          %172 = sbr.rel (%p170) target = $region16
        $region15: #{tpu_custom_call.1} parent=11 // pred_region
          %s174 = ssub.s32 1024, 1024
          %175 = vsyncadd [#allocation6], %s174
          %s176 = sshll.u32 [#allocation5], 4
          %s177 = int_to_ptr.vmem [resolvable:$true] %s176
          %182 = dma.hbm_to_vmem [thread:$0]  %s1, 1024, %s177, [#allocation6], 64, 64, 4
        $region16: #{tpu_custom_call.1} parent=11 // pred_fallthru
          _
        // Predicated region
        $region17: #{tpu_custom_call.1} parent=11 // pred_check
          %p183 = pneg %p87
        $region18: #{tpu_custom_call.1} parent=11 // pred_check_branch
          %185 = sbr.rel (%p183) target = $region20
        $region19: #{tpu_custom_call.1} parent=11 // pred_region
          %s187 = ssub.s32 16, 16
          %188 = vsyncadd [#allocation6], %s187
          %s190 = sshll.u32 [#allocation7], 4
          %s191 = int_to_ptr.vmem [resolvable:$true] %s190
          %193 = dma.hbm_to_vmem [thread:$0]  %s2, 16, %s191, [#allocation6]
        $region20: #{tpu_custom_call.1} parent=11 // pred_fallthru
          _
        // Predicated region
        $region21: #{tpu_custom_call.1} parent=11 // pred_check
          %p194 = pneg %p108
        $region22: #{tpu_custom_call.1} parent=11 // pred_check_branch
          %196 = sbr.rel (%p194) target = $region24
        $region23: #{tpu_custom_call.1} parent=11 // pred_region
          %s198 = ssub.s32 1024, 1024
          %199 = vsyncadd [#allocation9], %s198
          %s200 = sshll.u32 [#allocation8], 4
          %s201 = int_to_ptr.vmem [resolvable:$true] %s200
          %206 = dma.hbm_to_vmem [thread:$0]  %s3, 1024, %s201, [#allocation9], 64, 64, 4
        $region24: #{tpu_custom_call.1} parent=11 // pred_fallthru
          _
        // Predicated region
        $region25: #{tpu_custom_call.1} parent=11 // pred_check
          %p207 = pneg %p129
        $region26: #{tpu_custom_call.1} parent=11 // pred_check_branch
          %209 = sbr.rel (%p207) target = $region28
        $region27: #{tpu_custom_call.1} parent=11 // pred_region
          %s211 = ssub.s32 16, 16
          %212 = vsyncadd [#allocation9], %s211
          %s214 = sshll.u32 [#allocation10], 4
          %s215 = int_to_ptr.vmem [resolvable:$true] %s214
          %217 = dma.hbm_to_vmem [thread:$0]  %s4, 16, %s215, [#allocation9]
        $region28: #{tpu_custom_call.1} parent=11 // pred_fallthru
          _
      $region12: #{tpu_custom_call.1} parent=5 // pred_fallthru
        _
      %p218 = scmp.lt.s32.totalorder %s19, 2
      // Predicated region
      $region29: #{tpu_custom_call.1} parent=5 // pred_check
        %p219 = pneg %p218
      $region30: #{tpu_custom_call.1} parent=5 // pred_check_branch
        %221 = sbr.rel (%p219) target = $region32
      $region31: #{tpu_custom_call.1} parent=5 // pred_region
        // Predicated region
        $region33: #{tpu_custom_call.1} parent=31 // pred_check
          %p222 = pneg %p39
        $region34: #{tpu_custom_call.1} parent=31 // pred_check_branch
          %224 = sbr.rel (%p222) target = $region36
        $region35: #{tpu_custom_call.1} parent=31 // pred_region
          %s225 = sand.u32 %s29, 1
          %s226 = scalar_lea.sflag [#allocation3], %s225
          %s227 = sand.u32 %s29, 1
          %s228 = smul.addr %s227, 64
          %s229 = scalar_lea.vmem [#allocation2], %s228
          %s230 = smul.u32 16, %s19
          %s232 = ssub.s32 1024, 1024
          %233 = vsyncadd %s226, %s232
          %s234 = smul.addr %s230, 64
          %s235 = scalar_lea.hbm %s0, %s234
          %s236 = sshll.u32 %s229, 4
          %s237 = int_to_ptr.vmem [resolvable:$true] %s236
          %242 = dma.hbm_to_vmem [thread:$0]  %s235, 1024, %s237, %s226, 64, 64, 4
        $region36: #{tpu_custom_call.1} parent=31 // pred_fallthru
          _
      $region32: #{tpu_custom_call.1} parent=5 // pred_fallthru
        _
      %p243 = scmp.le.s32.totalorder 1, %s19
      %p244 = scmp.lt.s32.totalorder %s19, 3
      %p245 = pnand %p243, %p244
      %p246 = pneg %p245
      // Predicated region
      $region37: #{tpu_custom_call.1} parent=5 // pred_check
        _
      $region38: #{tpu_custom_call.1} parent=5 // pred_check_branch
        %248 = sbr.rel (%p245) target = $region40
      $region39: #{tpu_custom_call.1} parent=5 // pred_region
        %s249 = ssub.s32 %s19, 1
        %s250 = sand.u32 %s32, 1
        %s251 = scalar_lea.sflag [#allocation3], %s250
        %s252 = sand.u32 %s32, 1
        %s253 = smul.addr %s252, 64
        %s254 = scalar_lea.vmem [#allocation2], %s253
        // Predicated region
        $region41: #{tpu_custom_call.1} parent=39 // pred_check
          %p255 = pneg %p45
        $region42: #{tpu_custom_call.1} parent=39 // pred_check_branch
          %257 = sbr.rel (%p255) target = $region44
        $region43: #{tpu_custom_call.1} parent=39 // pred_region
          %258 = dma.done %s251, 1024
        $region44: #{tpu_custom_call.1} parent=39 // pred_fallthru
          _
        // Predicated region
        $region45: #{tpu_custom_call.1} parent=39 // pred_check
          %p259 = pneg %p66
        $region46: #{tpu_custom_call.1} parent=39 // pred_check_branch
          %261 = sbr.rel (%p259) target = $region48
        $region47: #{tpu_custom_call.1} parent=39 // pred_region
          %262 = dma.done [#allocation6], 1024
        $region48: #{tpu_custom_call.1} parent=39 // pred_fallthru
          _
        // Predicated region
        $region49: #{tpu_custom_call.1} parent=39 // pred_check
          %p263 = pneg %p87
        $region50: #{tpu_custom_call.1} parent=39 // pred_check_branch
          %265 = sbr.rel (%p263) target = $region52
        $region51: #{tpu_custom_call.1} parent=39 // pred_region
          %266 = dma.done [#allocation6], 16
        $region52: #{tpu_custom_call.1} parent=39 // pred_fallthru
          _
        // Predicated region
        $region53: #{tpu_custom_call.1} parent=39 // pred_check
          %p267 = pneg %p108
        $region54: #{tpu_custom_call.1} parent=39 // pred_check_branch
          %269 = sbr.rel (%p267) target = $region56
        $region55: #{tpu_custom_call.1} parent=39 // pred_region
          %270 = dma.done [#allocation9], 1024
        $region56: #{tpu_custom_call.1} parent=39 // pred_fallthru
          _
        // Predicated region
        $region57: #{tpu_custom_call.1} parent=39 // pred_check
          %p271 = pneg %p129
        $region58: #{tpu_custom_call.1} parent=39 // pred_check_branch
          %273 = sbr.rel (%p271) target = $region60
        $region59: #{tpu_custom_call.1} parent=39 // pred_region
          %274 = dma.done [#allocation9], 16
        $region60: #{tpu_custom_call.1} parent=39 // pred_fallthru
          _
        %s275 = sand.u32 %s32, 1
        %s276 = scalar_lea.sflag [#allocation3], %s275
        %s277 = sand.u32 %s32, 1
        %s278 = smul.addr %s277, 64
        %s279 = scalar_lea.vmem [#allocation2], %s278
        %p280 = pneg %p45
        %p281 = pneg %p42
        %p282 = pneg %p66
        %p283 = pneg %p63
        %p284 = pneg %p87
        %p285 = pneg %p84
        %p286 = pneg %p108
        %p287 = pneg %p105
        %p288 = pneg %p129
        %p289 = pneg %p126
        %p290 = pneg %p155
        %p291 = pneg %p152
        %s292 = sand.u32 %s142, 1
        %s293 = scalar_lea.sflag [#allocation4], %s292
        %s294 = sand.u32 %s142, 1
        %s295 = smul.addr %s294, 128
        %s296 = scalar_lea.vmem [#allocation11], %s295
        %s297 = smul.u32 16, %s24
        %s298 = smul.u32 16, %s24
        %v300 = vld [vmem:[%s254] sm:$0xf]
        %v301 = vld [vmem:[%s254 + $0x4] sm:$0xf]
        %v302 = vld [vmem:[%s254 + $0x8] sm:$0xf]
        %v303 = vld [vmem:[%s254 + $0xc] sm:$0xf]
        %v304 = vld [vmem:[%s254 + $0x10] sm:$0xf]
        %v305 = vld [vmem:[%s254 + $0x14] sm:$0xf]
        %v306 = vld [vmem:[%s254 + $0x18] sm:$0xf]
        %v307 = vld [vmem:[%s254 + $0x1c] sm:$0xf]
        %v308 = vld [vmem:[%s254 + $0x20] sm:$0xf]
        %v309 = vld [vmem:[%s254 + $0x24] sm:$0xf]
        %v310 = vld [vmem:[%s254 + $0x28] sm:$0xf]
        %v311 = vld [vmem:[%s254 + $0x2c] sm:$0xf]
        %v312 = vld [vmem:[%s254 + $0x30] sm:$0xf]
        %v313 = vld [vmem:[%s254 + $0x34] sm:$0xf]
        %v314 = vld [vmem:[%s254 + $0x38] sm:$0xf]
        %v315 = vld [vmem:[%s254 + $0x3c] sm:$0xf]
        %v316 = vld [vmem:[#allocation5] sm:$0xf]
        %v317 = vld [vmem:[#allocation5 + $0x4] sm:$0xf]
        %v318 = vld [vmem:[#allocation5 + $0x8] sm:$0xf]
        %v319 = vld [vmem:[#allocation5 + $0xc] sm:$0xf]
        %v320 = vld [vmem:[#allocation5 + $0x10] sm:$0xf]
        %v321 = vld [vmem:[#allocation5 + $0x14] sm:$0xf]
        %v322 = vld [vmem:[#allocation5 + $0x18] sm:$0xf]
        %v323 = vld [vmem:[#allocation5 + $0x1c] sm:$0xf]
        %v324 = vld [vmem:[#allocation5 + $0x20] sm:$0xf]
        %v325 = vld [vmem:[#allocation5 + $0x24] sm:$0xf]
        %v326 = vld [vmem:[#allocation5 + $0x28] sm:$0xf]
        %v327 = vld [vmem:[#allocation5 + $0x2c] sm:$0xf]
        %v328 = vld [vmem:[#allocation5 + $0x30] sm:$0xf]
        %v329 = vld [vmem:[#allocation5 + $0x34] sm:$0xf]
        %v330 = vld [vmem:[#allocation5 + $0x38] sm:$0xf]
        %v331 = vld [vmem:[#allocation5 + $0x3c] sm:$0xf]
        %v332 = vld [vmem:[#allocation7] sm:$0x1]
        %v334 = vlaneseq
        %v335 = vshrl.u32 %v334, 7
        %v336 = vsub.s32 0, %v335
        %v337 = vrot.slane %v332, %v336
        %v355 = vunpack.c.l.b16 %v300
        %v356 = vunpack.c.l.b16 %v301
        %v357 = vunpack.c.l.b16 %v302
        %v358 = vunpack.c.l.b16 %v303
        %v359 = vunpack.c.l.b16 %v304
        %v360 = vunpack.c.l.b16 %v305
        %v361 = vunpack.c.l.b16 %v306
        %v362 = vunpack.c.l.b16 %v307
        %v363 = vunpack.c.l.b16 %v308
        %v364 = vunpack.c.l.b16 %v309
        %v365 = vunpack.c.l.b16 %v310
        %v366 = vunpack.c.l.b16 %v311
        %v367 = vunpack.c.l.b16 %v312
        %v368 = vunpack.c.l.b16 %v313
        %v369 = vunpack.c.l.b16 %v314
        %v370 = vunpack.c.l.b16 %v315
        %v371 = vpack.c.b16 %v356, %v355
        %v372 = vpack.c.b16 %v358, %v357
        %v373 = vpack.c.b16 %v360, %v359
        %v374 = vpack.c.b16 %v362, %v361
        %v375 = vpack.c.b16 %v364, %v363
        %v376 = vpack.c.b16 %v366, %v365
        %v377 = vpack.c.b16 %v368, %v367
        %v378 = vpack.c.b16 %v370, %v369
        %v403 = vunpack.c.l.b16 %v316
        %v404 = vunpack.c.l.b16 %v317
        %v405 = vunpack.c.l.b16 %v318
        %v406 = vunpack.c.l.b16 %v319
        %v407 = vunpack.c.l.b16 %v320
        %v408 = vunpack.c.l.b16 %v321
        %v409 = vunpack.c.l.b16 %v322
        %v410 = vunpack.c.l.b16 %v323
        %v411 = vunpack.c.l.b16 %v324
        %v412 = vunpack.c.l.b16 %v325
        %v413 = vunpack.c.l.b16 %v326
        %v414 = vunpack.c.l.b16 %v327
        %v415 = vunpack.c.l.b16 %v328
        %v416 = vunpack.c.l.b16 %v329
        %v417 = vunpack.c.l.b16 %v330
        %v418 = vunpack.c.l.b16 %v331
        %v419 = vpack.c.b16 %v404, %v403
        %v420 = vpack.c.b16 %v406, %v405
        %v421 = vpack.c.b16 %v408, %v407
        %v422 = vpack.c.b16 %v410, %v409
        %v423 = vpack.c.b16 %v412, %v411
        %v424 = vpack.c.b16 %v414, %v413
        %v425 = vpack.c.b16 %v416, %v415
        %v426 = vpack.c.b16 %v418, %v417
        %435 = vmatprep.subr.bf16.mxu0 0
        %436 = vmatpush1.bf16.msra.mxu0 %v419
        %437 = vmatprep.subr.bf16.mxu0 0
        %438 = vmatpush1.bf16.msra.mxu0 %v420
        %439 = vmatprep.subr.bf16.mxu0 0
        %440 = vmatpush1.bf16.msra.mxu0 %v421
        %441 = vmatprep.subr.bf16.mxu0 0
        %442 = vmatpush1.bf16.msra.mxu0 %v422
        %443 = vmatprep.subr.bf16.mxu0 0
        %444 = vmatpush1.bf16.msra.mxu0 %v423
        %445 = vmatprep.subr.bf16.mxu0 0
        %446 = vmatpush1.bf16.msra.mxu0 %v424
        %447 = vmatprep.subr.bf16.mxu0 0
        %448 = vmatpush1.bf16.msra.mxu0 %v425
        %449 = vmatprep.subr.bf16.mxu0 0
        %450 = vmatpush1.bf16.msra.mxu0 %v426
        %451 = vmatprep.subr.bf16.mxu0 0
        %452 = vmatpush1.bf16.msra.mxu0 0
        %453 = vmatprep.subr.bf16.mxu0 0
        %454 = vmatpush1.bf16.msra.mxu0 0
        %455 = vmatprep.subr.bf16.mxu0 0
        %456 = vmatpush1.bf16.msra.mxu0 0
        %457 = vmatprep.subr.bf16.mxu0 0
        %458 = vmatpush1.bf16.msra.mxu0 0
        %459 = vmatprep.subr.bf16.mxu0 0
        %460 = vmatpush1.bf16.msra.mxu0 0
        %461 = vmatprep.subr.bf16.mxu0 0
        %462 = vmatpush1.bf16.msra.mxu0 0
        %463 = vmatprep.subr.bf16.mxu0 0
        %464 = vmatpush1.bf16.msra.mxu0 0
        %465 = vmatprep.subr.bf16.mxu0 0
        %466 = vmatpush1.bf16.msra.mxu0 0
        %467 = vmatprep.mubr.bf16.mxu0 0
        %468 = vmatmul.mubr.bf16.gmra.mrb[0].mxu0 %v371
        %v469 = vpop.f32.mrb[0].mxu0
        %v470 = vadd.f32 %v337, %v469
        %v471 = vpop.f32.mrb[0].mxu0
        %v472 = vpop.f32.mrb[0].mxu0
        %v473 = vadd.f32 %v337, %v472
        %v474 = vpop.f32.mrb[0].mxu0
        %475 = vmatprep.mubr.bf16.mxu0 0
        %476 = vmatmul.mubr.bf16.gmra.mrb[0].mxu0 %v372
        %v477 = vpop.f32.mrb[0].mxu0
        %v478 = vadd.f32 %v337, %v477
        %v479 = vpop.f32.mrb[0].mxu0
        %v480 = vpop.f32.mrb[0].mxu0
        %v481 = vadd.f32 %v337, %v480
        %v482 = vpop.f32.mrb[0].mxu0
        %483 = vmatprep.mubr.bf16.mxu0 0
        %484 = vmatmul.mubr.bf16.gmra.mrb[0].mxu0 %v373
        %v485 = vpop.f32.mrb[0].mxu0
        %v486 = vadd.f32 %v337, %v485
        %v487 = vpop.f32.mrb[0].mxu0
        %v488 = vpop.f32.mrb[0].mxu0
        %v489 = vadd.f32 %v337, %v488
        %v490 = vpop.f32.mrb[0].mxu0
        %491 = vmatprep.mubr.bf16.mxu0 0
        %492 = vmatmul.mubr.bf16.gmra.mrb[0].mxu0 %v374
        %v493 = vpop.f32.mrb[0].mxu0
        %v494 = vadd.f32 %v337, %v493
        %v495 = vpop.f32.mrb[0].mxu0
        %v496 = vpop.f32.mrb[0].mxu0
        %v497 = vadd.f32 %v337, %v496
        %v498 = vpop.f32.mrb[0].mxu0
        %499 = vmatprep.mubr.bf16.mxu0 0
        %500 = vmatmul.mubr.bf16.gmra.mrb[0].mxu0 %v375
        %v501 = vpop.f32.mrb[0].mxu0
        %v502 = vadd.f32 %v337, %v501
        %v503 = vpop.f32.mrb[0].mxu0
        %v504 = vpop.f32.mrb[0].mxu0
        %v505 = vadd.f32 %v337, %v504
        %v506 = vpop.f32.mrb[0].mxu0
        %507 = vmatprep.mubr.bf16.mxu0 0
        %508 = vmatmul.mubr.bf16.gmra.mrb[0].mxu0 %v376
        %v509 = vpop.f32.mrb[0].mxu0
        %v510 = vadd.f32 %v337, %v509
        %v511 = vpop.f32.mrb[0].mxu0
        %v512 = vpop.f32.mrb[0].mxu0
        %v513 = vadd.f32 %v337, %v512
        %v514 = vpop.f32.mrb[0].mxu0
        %515 = vmatprep.mubr.bf16.mxu0 0
        %516 = vmatmul.mubr.bf16.gmra.mrb[0].mxu0 %v377
        %v517 = vpop.f32.mrb[0].mxu0
        %v518 = vadd.f32 %v337, %v517
        %v519 = vpop.f32.mrb[0].mxu0
        %v520 = vpop.f32.mrb[0].mxu0
        %v521 = vadd.f32 %v337, %v520
        %v522 = vpop.f32.mrb[0].mxu0
        %523 = vmatprep.mubr.bf16.mxu0 0
        %524 = vmatmul.mubr.bf16.gmra.mrb[0].mxu0 %v378
        %v525 = vpop.f32.mrb[0].mxu0
        %v526 = vadd.f32 %v337, %v525
        %v527 = vpop.f32.mrb[0].mxu0
        %v528 = vpop.f32.mrb[0].mxu0
        %v529 = vadd.f32 %v337, %v528
        %v530 = vpop.f32.mrb[0].mxu0
        %531 = vdwg.mxu0
        %v532 = vmul.f32 %v470, 0.5
        %v533 = vmul.f32 %v473, 0.5
        %v534 = vmul.f32 %v478, 0.5
        %v535 = vmul.f32 %v481, 0.5
        %v536 = vmul.f32 %v486, 0.5
        %v537 = vmul.f32 %v489, 0.5
        %v538 = vmul.f32 %v494, 0.5
        %v539 = vmul.f32 %v497, 0.5
        %v540 = vmul.f32 %v502, 0.5
        %v541 = vmul.f32 %v505, 0.5
        %v542 = vmul.f32 %v510, 0.5
        %v543 = vmul.f32 %v513, 0.5
        %v544 = vmul.f32 %v518, 0.5
        %v545 = vmul.f32 %v521, 0.5
        %v546 = vmul.f32 %v526, 0.5
        %v547 = vmul.f32 %v529, 0.5
        %v548 = vmul.f32 %v470, 0.70710677
        %v549 = vmul.f32 %v473, 0.70710677
        %v550 = vmul.f32 %v478, 0.70710677
        %v551 = vmul.f32 %v481, 0.70710677
        %v552 = vmul.f32 %v486, 0.70710677
        %v553 = vmul.f32 %v489, 0.70710677
        %v554 = vmul.f32 %v494, 0.70710677
        %v555 = vmul.f32 %v497, 0.70710677
        %v556 = vmul.f32 %v502, 0.70710677
        %v557 = vmul.f32 %v505, 0.70710677
        %v558 = vmul.f32 %v510, 0.70710677
        %v559 = vmul.f32 %v513, 0.70710677
        %v560 = vmul.f32 %v518, 0.70710677
        %v561 = vmul.f32 %v521, 0.70710677
        %v562 = vmul.f32 %v526, 0.70710677
        %v563 = vmul.f32 %v529, 0.70710677
        %v564 = verf.f32.pop %v548
        %v565 = verf.f32.pop %v549
        %v566 = verf.f32.pop %v550
        %v567 = verf.f32.pop %v551
        %v568 = verf.f32.pop %v552
        %v569 = verf.f32.pop %v553
        %v570 = verf.f32.pop %v554
        %v571 = verf.f32.pop %v555
        %v572 = verf.f32.pop %v556
        %v573 = verf.f32.pop %v557
        %v574 = verf.f32.pop %v558
        %v575 = verf.f32.pop %v559
        %v576 = verf.f32.pop %v560
        %v577 = verf.f32.pop %v561
        %v578 = verf.f32.pop %v562
        %v579 = verf.f32.pop %v563
        %v580 = vadd.f32 %v564, 1.0
        %v581 = vadd.f32 %v565, 1.0
        %v582 = vadd.f32 %v566, 1.0
        %v583 = vadd.f32 %v567, 1.0
        %v584 = vadd.f32 %v568, 1.0
        %v585 = vadd.f32 %v569, 1.0
        %v586 = vadd.f32 %v570, 1.0
        %v587 = vadd.f32 %v571, 1.0
        %v588 = vadd.f32 %v572, 1.0
        %v589 = vadd.f32 %v573, 1.0
        %v590 = vadd.f32 %v574, 1.0
        %v591 = vadd.f32 %v575, 1.0
        %v592 = vadd.f32 %v576, 1.0
        %v593 = vadd.f32 %v577, 1.0
        %v594 = vadd.f32 %v578, 1.0
        %v595 = vadd.f32 %v579, 1.0
        %v596 = vmul.f32 %v532, %v580
        %v597 = vmul.f32 %v533, %v581
        %v598 = vmul.f32 %v534, %v582
        %v599 = vmul.f32 %v535, %v583
        %v600 = vmul.f32 %v536, %v584
        %v601 = vmul.f32 %v537, %v585
        %v602 = vmul.f32 %v538, %v586
        %v603 = vmul.f32 %v539, %v587
        %v604 = vmul.f32 %v540, %v588
        %v605 = vmul.f32 %v541, %v589
        %v606 = vmul.f32 %v542, %v590
        %v607 = vmul.f32 %v543, %v591
        %v608 = vmul.f32 %v544, %v592
        %v609 = vmul.f32 %v545, %v593
        %v610 = vmul.f32 %v546, %v594
        %v611 = vmul.f32 %v547, %v595
        %v612 = vpack.c.bf16 %v597, %v596
        %v613 = vpack.c.bf16 %v599, %v598
        %v614 = vpack.c.bf16 %v601, %v600
        %v615 = vpack.c.bf16 %v603, %v602
        %v616 = vpack.c.bf16 %v605, %v604
        %v617 = vpack.c.bf16 %v607, %v606
        %v618 = vpack.c.bf16 %v609, %v608
        %v619 = vpack.c.bf16 %v611, %v610
        %v620 = vld [vmem:[#allocation8] sm:$0xf]
        %v621 = vld [vmem:[#allocation8 + $0x4] sm:$0xf]
        %v622 = vld [vmem:[#allocation8 + $0x8] sm:$0xf]
        %v623 = vld [vmem:[#allocation8 + $0xc] sm:$0xf]
        %v624 = vld [vmem:[#allocation8 + $0x10] sm:$0xf]
        %v625 = vld [vmem:[#allocation8 + $0x14] sm:$0xf]
        %v626 = vld [vmem:[#allocation8 + $0x18] sm:$0xf]
        %v627 = vld [vmem:[#allocation8 + $0x1c] sm:$0xf]
        %v628 = vld [vmem:[#allocation8 + $0x20] sm:$0xf]
        %v629 = vld [vmem:[#allocation8 + $0x24] sm:$0xf]
        %v630 = vld [vmem:[#allocation8 + $0x28] sm:$0xf]
        %v631 = vld [vmem:[#allocation8 + $0x2c] sm:$0xf]
        %v632 = vld [vmem:[#allocation8 + $0x30] sm:$0xf]
        %v633 = vld [vmem:[#allocation8 + $0x34] sm:$0xf]
        %v634 = vld [vmem:[#allocation8 + $0x38] sm:$0xf]
        %v635 = vld [vmem:[#allocation8 + $0x3c] sm:$0xf]
        %v636 = vld [vmem:[#allocation10] sm:$0x1]
        %v638 = vlaneseq
        %v639 = vshrl.u32 %v638, 7
        %v640 = vsub.s32 0, %v639
        %v641 = vrot.slane %v636, %v640
        %v659 = vunpack.c.l.b16 %v620
        %v660 = vunpack.c.l.b16 %v621
        %v661 = vunpack.c.l.b16 %v622
        %v662 = vunpack.c.l.b16 %v623
        %v663 = vunpack.c.l.b16 %v624
        %v664 = vunpack.c.l.b16 %v625
        %v665 = vunpack.c.l.b16 %v626
        %v666 = vunpack.c.l.b16 %v627
        %v667 = vunpack.c.l.b16 %v628
        %v668 = vunpack.c.l.b16 %v629
        %v669 = vunpack.c.l.b16 %v630
        %v670 = vunpack.c.l.b16 %v631
        %v671 = vunpack.c.l.b16 %v632
        %v672 = vunpack.c.l.b16 %v633
        %v673 = vunpack.c.l.b16 %v634
        %v674 = vunpack.c.l.b16 %v635
        %v675 = vpack.c.b16 %v660, %v659
        %v676 = vpack.c.b16 %v662, %v661
        %v677 = vpack.c.b16 %v664, %v663
        %v678 = vpack.c.b16 %v666, %v665
        %v679 = vpack.c.b16 %v668, %v667
        %v680 = vpack.c.b16 %v670, %v669
        %v681 = vpack.c.b16 %v672, %v671
        %v682 = vpack.c.b16 %v674, %v673
        %691 = vmatprep.subr.bf16.mxu0 0
        %692 = vmatpush1.bf16.msra.mxu0 %v675
        %693 = vmatprep.subr.bf16.mxu0 0
        %694 = vmatpush1.bf16.msra.mxu0 %v676
        %695 = vmatprep.subr.bf16.mxu0 0
        %696 = vmatpush1.bf16.msra.mxu0 %v677
        %697 = vmatprep.subr.bf16.mxu0 0
        %698 = vmatpush1.bf16.msra.mxu0 %v678
        %699 = vmatprep.subr.bf16.mxu0 0
        %700 = vmatpush1.bf16.msra.mxu0 %v679
        %701 = vmatprep.subr.bf16.mxu0 0
        %702 = vmatpush1.bf16.msra.mxu0 %v680
        %703 = vmatprep.subr.bf16.mxu0 0
        %704 = vmatpush1.bf16.msra.mxu0 %v681
        %705 = vmatprep.subr.bf16.mxu0 0
        %706 = vmatpush1.bf16.msra.mxu0 %v682
        %707 = vmatprep.subr.bf16.mxu0 0
        %708 = vmatpush1.bf16.msra.mxu0 0
        %709 = vmatprep.subr.bf16.mxu0 0
        %710 = vmatpush1.bf16.msra.mxu0 0
        %711 = vmatprep.subr.bf16.mxu0 0
        %712 = vmatpush1.bf16.msra.mxu0 0
        %713 = vmatprep.subr.bf16.mxu0 0
        %714 = vmatpush1.bf16.msra.mxu0 0
        %715 = vmatprep.subr.bf16.mxu0 0
        %716 = vmatpush1.bf16.msra.mxu0 0
        %717 = vmatprep.subr.bf16.mxu0 0
        %718 = vmatpush1.bf16.msra.mxu0 0
        %719 = vmatprep.subr.bf16.mxu0 0
        %720 = vmatpush1.bf16.msra.mxu0 0
        %721 = vmatprep.subr.bf16.mxu0 0
        %722 = vmatpush1.bf16.msra.mxu0 0
        %723 = vmatprep.mubr.bf16.mxu0 0
        %724 = vmatmul.mubr.bf16.gmra.mrb[0].mxu0 %v612
        %v725 = vpop.f32.mrb[0].mxu0
        %v726 = vadd.f32 %v641, %v725
        %v727 = vpop.f32.mrb[0].mxu0
        %v728 = vpop.f32.mrb[0].mxu0
        %v729 = vadd.f32 %v641, %v728
        %v730 = vpop.f32.mrb[0].mxu0
        %731 = vmatprep.mubr.bf16.mxu0 0
        %732 = vmatmul.mubr.bf16.gmra.mrb[0].mxu0 %v613
        %v733 = vpop.f32.mrb[0].mxu0
        %v734 = vadd.f32 %v641, %v733
        %v735 = vpop.f32.mrb[0].mxu0
        %v736 = vpop.f32.mrb[0].mxu0
        %v737 = vadd.f32 %v641, %v736
        %v738 = vpop.f32.mrb[0].mxu0
        %739 = vmatprep.mubr.bf16.mxu0 0
        %740 = vmatmul.mubr.bf16.gmra.mrb[0].mxu0 %v614
        %v741 = vpop.f32.mrb[0].mxu0
        %v742 = vadd.f32 %v641, %v741
        %v743 = vpop.f32.mrb[0].mxu0
        %v744 = vpop.f32.mrb[0].mxu0
        %v745 = vadd.f32 %v641, %v744
        %v746 = vpop.f32.mrb[0].mxu0
        %747 = vmatprep.mubr.bf16.mxu0 0
        %748 = vmatmul.mubr.bf16.gmra.mrb[0].mxu0 %v615
        %v749 = vpop.f32.mrb[0].mxu0
        %v750 = vadd.f32 %v641, %v749
        %v751 = vpop.f32.mrb[0].mxu0
        %v752 = vpop.f32.mrb[0].mxu0
        %v753 = vadd.f32 %v641, %v752
        %v754 = vpop.f32.mrb[0].mxu0
        %755 = vmatprep.mubr.bf16.mxu0 0
        %756 = vmatmul.mubr.bf16.gmra.mrb[0].mxu0 %v616
        %v757 = vpop.f32.mrb[0].mxu0
        %v758 = vadd.f32 %v641, %v757
        %v759 = vpop.f32.mrb[0].mxu0
        %v760 = vpop.f32.mrb[0].mxu0
        %v761 = vadd.f32 %v641, %v760
        %v762 = vpop.f32.mrb[0].mxu0
        %763 = vmatprep.mubr.bf16.mxu0 0
        %764 = vmatmul.mubr.bf16.gmra.mrb[0].mxu0 %v617
        %v765 = vpop.f32.mrb[0].mxu0
        %v766 = vadd.f32 %v641, %v765
        %v767 = vpop.f32.mrb[0].mxu0
        %v768 = vpop.f32.mrb[0].mxu0
        %v769 = vadd.f32 %v641, %v768
        %v770 = vpop.f32.mrb[0].mxu0
        %771 = vmatprep.mubr.bf16.mxu0 0
        %772 = vmatmul.mubr.bf16.gmra.mrb[0].mxu0 %v618
        %v773 = vpop.f32.mrb[0].mxu0
        %v774 = vadd.f32 %v641, %v773
        %v775 = vpop.f32.mrb[0].mxu0
        %v776 = vpop.f32.mrb[0].mxu0
        %v777 = vadd.f32 %v641, %v776
        %v778 = vpop.f32.mrb[0].mxu0
        %779 = vmatprep.mubr.bf16.mxu0 0
        %780 = vmatmul.mubr.bf16.gmra.mrb[0].mxu0 %v619
        %v781 = vpop.f32.mrb[0].mxu0
        %v782 = vadd.f32 %v641, %v781
        %v783 = vpop.f32.mrb[0].mxu0
        %v784 = vpop.f32.mrb[0].mxu0
        %v785 = vadd.f32 %v641, %v784
        %v786 = vpop.f32.mrb[0].mxu0
        %787 = vdwg.mxu0
        %788 = vst [vmem:[%s296] sm:$0xff] %v726
        %789 = vst [vmem:[%s296 + $0x8] sm:$0xff] %v729
        %790 = vst [vmem:[%s296 + $0x10] sm:$0xff] %v734
        %791 = vst [vmem:[%s296 + $0x18] sm:$0xff] %v737
        %792 = vst [vmem:[%s296 + $0x20] sm:$0xff] %v742
        %793 = vst [vmem:[%s296 + $0x28] sm:$0xff] %v745
        %794 = vst [vmem:[%s296 + $0x30] sm:$0xff] %v750
        %795 = vst [vmem:[%s296 + $0x38] sm:$0xff] %v753
        %796 = vst [vmem:[%s296 + $0x40] sm:$0xff] %v758
        %797 = vst [vmem:[%s296 + $0x48] sm:$0xff] %v761
        %798 = vst [vmem:[%s296 + $0x50] sm:$0xff] %v766
        %799 = vst [vmem:[%s296 + $0x58] sm:$0xff] %v769
        %800 = vst [vmem:[%s296 + $0x60] sm:$0xff] %v774
        %801 = vst [vmem:[%s296 + $0x68] sm:$0xff] %v777
        %802 = vst [vmem:[%s296 + $0x70] sm:$0xff] %v782
        %803 = vst [vmem:[%s296 + $0x78] sm:$0xff] %v785
        %s804 = sand.u32 %s142, 1
        %s805 = scalar_lea.sflag [#allocation4], %s804
        %s806 = sand.u32 %s142, 1
        %s807 = smul.addr %s806, 128
        %s808 = scalar_lea.vmem [#allocation11], %s807
        // Predicated region
        $region61: #{tpu_custom_call.1} parent=39 // pred_check
          %p809 = pneg %p152
        $region62: #{tpu_custom_call.1} parent=39 // pred_check_branch
          %811 = sbr.rel (%p809) target = $region64
        $region63: #{tpu_custom_call.1} parent=39 // pred_region
          %s812 = smul.u32 16, %s24
          %s814 = ssub.s32 2048, 2048
          %815 = vsyncadd %s805, %s814
          %s816 = smul.addr %s812, 128
          %s817 = scalar_lea.hbm %s5, %s816
          %s818 = sshll.u32 %s808, 4
          %s819 = int_to_ptr.vmem [resolvable:$true] %s818
          %824 = dma.vmem_to_hbm [thread:$0]  %s819, 2048, %s817, %s805, 128, 128, 8
        $region64: #{tpu_custom_call.1} parent=39 // pred_fallthru
          _
      $region40: #{tpu_custom_call.1} parent=5 // pred_fallthru
        _
      %p825 = scmp.le.s32.totalorder 2, %s19
      // Predicated region
      $region65: #{tpu_custom_call.1} parent=5 // pred_check
        %p826 = pneg %p825
      $region66: #{tpu_custom_call.1} parent=5 // pred_check_branch
        %828 = sbr.rel (%p826) target = $region68
      $region67: #{tpu_custom_call.1} parent=5 // pred_region
        %s829 = ssub.s32 %s19, 2
        // Predicated region
        $region69: #{tpu_custom_call.1} parent=67 // pred_check
          %p830 = pneg %p158
        $region70: #{tpu_custom_call.1} parent=67 // pred_check_branch
          %832 = sbr.rel (%p830) target = $region72
        $region71: #{tpu_custom_call.1} parent=67 // pred_region
          %s833 = sand.u32 %s143, 1
          %s834 = scalar_lea.sflag [#allocation4], %s833
          %s835 = sand.u32 %s143, 1
          %s836 = smul.addr %s835, 128
          %s837 = scalar_lea.vmem [#allocation11], %s836
          %838 = dma.done %s834, 2048
        $region72: #{tpu_custom_call.1} parent=67 // pred_fallthru
          _
      $region68: #{tpu_custom_call.1} parent=5 // pred_fallthru
        _
    $region6: #{tpu_custom_call.1} parent=1 // loop_footer
      %s23 = sadd.s32 1, %s19
    $region7: #{tpu_custom_call.1} parent=1 // loop_footer_branch
      %18 = sbr.rel target = $region3
    $region8: #{tpu_custom_call.1} parent=1 // loop_exit
      _
    %839 = vsyncpa [#allocation3], 1
    %s840 = scalar_lea.sflag [#allocation3], 1
    %841 = vsyncpa %s840, 1
    %842 = vsyncpa [#allocation6], 1
    %843 = vsyncpa [#allocation9], 1
    %844 = vsyncpa [#allocation4], 1
    %s845 = scalar_lea.sflag [#allocation4], 1
    %846 = vsyncpa %s845, 1

</llo_original>
